<compile_context>
chip_gen: v7x
topology: tpu7x:2x2x1
jax: 0.10.0
libtpu: 0.0.40
codegen_flags: <defaults>
</compile_context>

<pallas_src>
import jax
import jax.numpy as jnp
import numpy as np
from jax.experimental import pallas as pl
from jax.experimental.pallas import tpu as pltpu

_LANE = 128
_SUBLANE = 8


def _round_up(x, m):
    return ((x + m - 1) // m) * m


def _cdiv(a, b):
    return (a + b - 1) // b


def _vmem_capacity_bytes():
    """Physical per-core VMEM; conservative v7x default if query fails."""
    try:
        info = pltpu.get_tpu_info()
        for attr in ("vmem_capacity_bytes", "vmem_size_bytes", "vmem_bytes"):
            v = getattr(info, attr, None)
            if v:
                return int(v)
    except Exception:
        pass
    return 64 << 20


def _spec(shape, index_map, buffers=None):
    """BlockSpec with explicit buffer depth; graceful fallback if the
    pipeline_mode kwarg is unavailable."""
    if buffers is not None:
        try:
            return pl.BlockSpec(shape, index_map,
                                pipeline_mode=pl.Buffered(buffers))
        except TypeError:
            pass
    return pl.BlockSpec(shape, index_map)


# --------------------------------------------------------------------------
# Kernel body: first layer (folded conv + stats branch) + MLP backbone.
# --------------------------------------------------------------------------
def _make_kernel(num_mid_layers):
    def kernel(*refs):
        x_ref, stats_ref, w_eff_ref, w1b_ref, b1_ref = refs[:5]
        idx = 5
        mid_refs = []
        for _ in range(num_mid_layers):
            mid_refs.append((refs[idx], refs[idx + 1]))
            idx += 2
        wout_ref, out_ref = refs[idx], refs[idx + 1]

        mm_dtype = w_eff_ref.dtype
        # First Linear (circular conv folded into w_eff); x cast in-register.
        h = jnp.dot(x_ref[...].astype(mm_dtype), w_eff_ref[...],
                    preferred_element_type=jnp.float32)
        h = h + jnp.dot(stats_ref[...].astype(mm_dtype), w1b_ref[...],
                        preferred_element_type=jnp.float32)
        h = jnp.maximum(h + b1_ref[...], 0.0)

        for w_ref, b_ref in mid_refs:
            h = jnp.dot(h.astype(w_ref.dtype), w_ref[...],
                        preferred_element_type=jnp.float32)
            h = jnp.maximum(h + b_ref[...], 0.0)

        y = jnp.dot(h.astype(wout_ref.dtype), wout_ref[...],
                    preferred_element_type=jnp.float32)
        out_ref[...] = y.astype(out_ref.dtype)

    return kernel


# --------------------------------------------------------------------------
# One-time weight preparation: fold conv, pad to lane width, cast.
# --------------------------------------------------------------------------
def _prepare_weights(params, enc_in, seq_len, kernel_size, matmul_dtype):
    assert kernel_size % 2 == 1, "circular-conv fold assumes odd kernel_size"
    pad = (kernel_size - 1) // 2
    E, S = enc_in, seq_len

    cw = params["conv_w"].astype(jnp.float32)          # (S, K)
    w1a = params["w1a"].astype(jnp.float32)            # (E, H0)
    w1b = params["w1b"].astype(jnp.float32)            # (E, H0)
    b1 = params["b1"].astype(jnp.float32)              # (1, H0)
    H0 = w1a.shape[1]

    # Fold circular Conv1d into the first Linear weight.
    e_idx = jnp.arange(E)
    w_eff = jnp.zeros((S, E, H0), jnp.float32)
    for k in range(kernel_size):
        rows = (e_idx - k + pad) % E
        w_eff = w_eff + cw[:, k][:, None, None] * w1a[rows, :][None, :, :]
    w_eff = w_eff.reshape(S * E, H0)

    def pad_cols(a, to):
        return jnp.pad(a, ((0, 0), (0, to - a.shape[1])))

    def pad_rows(a, to):
        return jnp.pad(a, ((0, to - a.shape[0]), (0, 0)))

    H0p = _round_up(H0, _LANE)
    w_eff_p = pad_cols(w_eff, H0p).astype(matmul_dtype)
    w1b_p = pad_cols(w1b, H0p).astype(matmul_dtype)
    b1_p = pad_cols(b1, H0p)                            # bias stays f32

    mids = []
    prev_p = H0p
    for (w, b) in params["mid"]:
        w = w.astype(jnp.float32)
        b = b.astype(jnp.float32)
        Hnp = _round_up(w.shape[1], _LANE)
        mids.append((pad_cols(pad_rows(w, prev_p), Hnp).astype(matmul_dtype),
                     pad_cols(b, Hnp)))
        prev_p = Hnp

    w_out = params["w_out"].astype(jnp.float32)
    O = w_out.shape[1]
    Op = _round_up(O, _LANE)
    w_out_p = pad_cols(pad_rows(w_out, prev_p), Op).astype(matmul_dtype)
    return w_eff_p, w1b_p, b1_p, mids, w_out_p, O, Op


# --------------------------------------------------------------------------
# Factory: prepare weights once, return a jitted forward(x, stats).
# --------------------------------------------------------------------------
def make_projector(params, enc_in, seq_len, *, kernel_size=3,
                   matmul_dtype=jnp.bfloat16, out_dtype=None,
                   interpret=False):
    w_eff, w1b, b1, mids, w_out, O, Op = _prepare_weights(
        params, enc_in, seq_len, kernel_size, matmul_dtype)
    weights = [w_eff, w1b, b1]
    for (w, b) in mids:
        weights += [w, b]
    weights += [w_out]
    num_mid = len(mids)
    out_dtype = jnp.dtype(matmul_dtype if out_dtype is None else out_dtype)

    E, S = enc_in, seq_len
    feat = S * E
    H0p = w_eff.shape[1]
    Hmax_p = max([H0p] + [w.shape[1] for (w, _) in mids] + [Op])
    weight_bytes = sum(int(a.size) * a.dtype.itemsize for a in weights)

    # Generation-aware VMEM budget: ~96 MiB on v5e/v6e (128 MiB VMEM),
    # ~40 MiB on v7x (64 MiB VMEM/TC).
    vmem_cap = _vmem_capacity_bytes()
    budget = (96 << 20) if vmem_cap >= (100 << 20) else (40 << 20)

    def forward_impl(x, stats, *w):
        B = x.shape[0]

        # ---- batch tile selection ------------------------------------
        if B <= _SUBLANE:
            TB = B                                   # block == full batch dim
        else:
            per_row = (3 * (feat + E) * 4            # x + stats (f32, <=3 buf)
                       + 2 * Op * out_dtype.itemsize  # double-buffered output
                       + 3 * Hmax_p * 4)              # live f32 intermediates
            avail = max(budget - weight_bytes - (4 << 20), 1 << 20)
            TB = min(avail // per_row, 1024, B)
            if B >= 2 * _SUBLANE:
                # keep >= 2 grid steps so megacore can shard the batch axis
                TB = min(TB, _round_up(_cdiv(B, 2), _SUBLANE))
            if TB >= 256:
                TB = (TB // _LANE) * _LANE
            else:
                TB = max((TB // _SUBLANE) * _SUBLANE, _SUBLANE)
        nb = _cdiv(B, TB)
        x_bufs = max(1, min(3, nb))                  # deepen x stream pipeline

        # ---- inputs: contiguous reshapes only (free under jit) --------
        x2d = x.reshape(B, feat)                     # stays f32, no copy/pad
        stats2d = stats.reshape(B, E)

        const2 = lambda i: (0, 0)
        in_specs = [
            _spec((TB, feat), lambda i: (i, 0), x_bufs),   # x stream
            _spec((TB, E), lambda i: (i, 0), x_bufs),      # stats stream
        ]
        for a in w:
            in_specs.append(_spec(a.shape, const2, 1))     # resident weights
        out_spec = pl.BlockSpec((TB, Op), lambda i: (i, 0))  # lane-dense slab

        # ---- advisory cost / VMEM hints -------------------------------
        flops = 2 * B * (feat * H0p + E * H0p)
        for (wm, _) in mids:
            flops += 2 * B * wm.shape[0] * wm.shape[1]
        flops += 2 * B * w_out.shape[0] * w_out.shape[1]
        bytes_accessed = (B * feat * 4 + B * E * 4 + weight_bytes
                          + B * Op * out_dtype.itemsize)

        vmem_need = (weight_bytes
                     + x_bufs * (TB * feat * 4 + TB * E * 4)
                     + 2 * TB * Op * out_dtype.itemsize
                     + 3 * TB * Hmax_p * 4 + (2 << 20))
        vmem_limit = int(min(max(vmem_need, 8 << 20), budget))

        fn = pl.pallas_call(
            _make_kernel(num_mid),
            out_shape=jax.ShapeDtypeStruct((B, Op), out_dtype),
            grid=(nb,),
            in_specs=in_specs,
            out_specs=out_spec,
            compiler_params=pltpu.CompilerParams(
                dimension_semantics=("parallel",),
                vmem_limit_bytes=vmem_limit),
            cost_estimate=pl.CostEstimate(flops=int(flops), transcendentals=0,
                                          bytes_accessed=int(bytes_accessed)),
            interpret=interpret,
        )
        y = fn(x2d, stats2d, *w)
        return y[:, :O]

    jitted = jax.jit(forward_impl)

    def forward(x, stats):
        return jitted(x, stats, *weights)

    return forward


# --------------------------------------------------------------------------
# Pure-JAX reference replicating the PyTorch forward exactly (f32).
# --------------------------------------------------------------------------
def projector_reference(x, stats, params, *, kernel_size=3):
    B, S, E = x.shape
    pad = (kernel_size - 1) // 2
    x_pad = jnp.concatenate([x[:, :, -pad:], x, x[:, :, :pad]], axis=-1)
    conv_w = params["conv_w"]                 # (S, K)
    conv = jnp.zeros((B, E), jnp.float32)
    for k in range(kernel_size):
        conv = conv + jnp.einsum("bse,s->be", x_pad[:, :, k:k + E], conv_w[:, k])
    feat = jnp.concatenate([conv, stats[:, 0, :]], axis=-1)       # (B, 2E)
    w1 = jnp.concatenate([params["w1a"], params["w1b"]], axis=0)  # (2E, H0)
    h = jax.nn.relu(feat @ w1 + params["b1"])
    for (w, b) in params["mid"]:
        h = jax.nn.relu(h @ w + b)
    return h @ params["w_out"]


def init_params(key, enc_in, seq_len, hidden_dims, hidden_layers, output_dim,
                kernel_size=3):
    keys = jax.random.split(key, 3 + 2 * hidden_layers)
    scale = 0.1
    ki = iter(keys)
    conv_w = scale * jax.random.normal(next(ki), (seq_len, kernel_size), jnp.float32)
    w1 = scale * jax.random.normal(next(ki), (2 * enc_in, hidden_dims[0]), jnp.float32)
    b1 = scale * jax.random.normal(next(ki), (1, hidden_dims[0]), jnp.float32)
    mid = []
    for i in range(hidden_layers - 1):
        w = scale * jax.random.normal(next(ki), (hidden_dims[i], hidden_dims[i + 1]),
                                      jnp.float32)
        b = scale * jax.random.normal(next(ki), (1, hidden_dims[i + 1]), jnp.float32)
        mid.append((w, b))
    w_out = scale * jax.random.normal(next(ki), (hidden_dims[-1], output_dim),
                                      jnp.float32)
    return {
        "conv_w": conv_w,
        "w1a": w1[:enc_in],
        "w1b": w1[enc_in:],
        "b1": b1,
        "mid": mid,
        "w_out": w_out,
    }


if __name__ == "__main__":
    # Small shapes consistent with the module's forward.
    B, enc_in, seq_len = 2, 4, 8
    hidden_dims = [32, 32]
    hidden_layers = 2
    output_dim = 4

    key = jax.random.PRNGKey(0)
    k_x, k_s, k_p = jax.random.split(key, 3)
    x = jax.random.normal(k_x, (B, seq_len, enc_in), jnp.float32)
    stats = jax.random.normal(k_s, (B, 1, enc_in), jnp.float32)
    params = init_params(k_p, enc_in, seq_len, hidden_dims, hidden_layers,
                         output_dim)

    y_ref = projector_reference(x, stats, params)

    # f32 matmul path: conv fold is mathematically exact -> tight tolerance.
    fwd_f32 = make_projector(params, enc_in, seq_len,
                             matmul_dtype=jnp.float32, out_dtype=jnp.float32)
    y_f32 = jax.block_until_ready(fwd_f32(x, stats))
    np.testing.assert_allclose(np.asarray(y_f32), np.asarray(y_ref),
                               rtol=1e-5, atol=1e-5)

    # Default bf16 matmul path (f32 accumulation, bf16 output): looser tol.
    fwd_bf16 = make_projector(params, enc_in, seq_len)
    y = jax.block_until_ready(fwd_bf16(x, stats))
    np.testing.assert_allclose(np.asarray(y.astype(jnp.float32)),
                               np.asarray(y_ref), rtol=2e-2, atol=2e-2)

    assert y.shape == (B, output_dim)
    print("KERNEL_OK")
</pallas_src>

<mosaic_0001>
module attributes {stable_mosaic.version = 11 : i64} {
  func.func @kernel(%arg0: i32, %arg1: memref<2x32xf32, #tpu.memory_space<vmem>>, %arg2: memref<2x4xf32, #tpu.memory_space<vmem>>, %arg3: memref<32x128xf32, #tpu.memory_space<vmem>>, %arg4: memref<4x128xf32, #tpu.memory_space<vmem>>, %arg5: memref<1x128xf32, #tpu.memory_space<vmem>>, %arg6: memref<128x128xf32, #tpu.memory_space<vmem>>, %arg7: memref<1x128xf32, #tpu.memory_space<vmem>>, %arg8: memref<128x128xf32, #tpu.memory_space<vmem>>, %arg9: memref<2x128xf32, #tpu.memory_space<vmem>>) attributes {dimension_semantics = [#tpu.dimension_semantics<parallel>], iteration_bounds = array<i64: 1>, scalar_prefetch = 0 : i64, scratch_operands = 0 : i64, tpu.core_type = #tpu.core_type<tc>, window_params = [{pipeline_mode = #tpu.pipeline_mode<synchronous>, transform_indices = @transform_0, window_bounds = array<i64: 2, 32>}, {pipeline_mode = #tpu.pipeline_mode<synchronous>, transform_indices = @transform_1, window_bounds = array<i64: 2, 4>}, {pipeline_mode = #tpu.pipeline_mode<synchronous>, transform_indices = @transform_2, window_bounds = array<i64: 32, 128>}, {pipeline_mode = #tpu.pipeline_mode<synchronous>, transform_indices = @transform_3, window_bounds = array<i64: 4, 128>}, {pipeline_mode = #tpu.pipeline_mode<synchronous>, transform_indices = @transform_4, window_bounds = array<i64: 1, 128>}, {pipeline_mode = #tpu.pipeline_mode<synchronous>, transform_indices = @transform_5, window_bounds = array<i64: 128, 128>}, {pipeline_mode = #tpu.pipeline_mode<synchronous>, transform_indices = @transform_6, window_bounds = array<i64: 1, 128>}, {pipeline_mode = #tpu.pipeline_mode<synchronous>, transform_indices = @transform_7, window_bounds = array<i64: 128, 128>}, {transform_indices = @transform_8, window_bounds = array<i64: 2, 128>}]} {
    %c0 = arith.constant 0 : index
    %c0_0 = arith.constant 0 : index
    %0 = vector.load %arg1[%c0, %c0_0] : memref<2x32xf32, #tpu.memory_space<vmem>>, vector<2x32xf32>
    %c0_1 = arith.constant 0 : index
    %c0_2 = arith.constant 0 : index
    %1 = vector.load %arg3[%c0_1, %c0_2] : memref<32x128xf32, #tpu.memory_space<vmem>>, vector<32x128xf32>
    %cst = arith.constant dense<0.000000e+00> : vector<2x128xf32>
    %2 = tpu.matmul %0, %1, %cst {dimension_numbers = #tpu.dot_dimension_numbers<[1], [0], [0], [1], [0, 0, 1, 1], [], []>} : vector<2x32xf32>, vector<32x128xf32>, vector<2x128xf32> -> vector<2x128xf32>
    %c0_3 = arith.constant 0 : index
    %c0_4 = arith.constant 0 : index
    %3 = vector.load %arg2[%c0_3, %c0_4] : memref<2x4xf32, #tpu.memory_space<vmem>>, vector<2x4xf32>
    %c0_5 = arith.constant 0 : index
    %c0_6 = arith.constant 0 : index
    %4 = vector.load %arg4[%c0_5, %c0_6] : memref<4x128xf32, #tpu.memory_space<vmem>>, vector<4x128xf32>
    %cst_7 = arith.constant dense<0.000000e+00> : vector<2x128xf32>
    %5 = tpu.matmul %3, %4, %cst_7 {dimension_numbers = #tpu.dot_dimension_numbers<[1], [0], [0], [1], [0, 0, 1, 1], [], []>} : vector<2x4xf32>, vector<4x128xf32>, vector<2x128xf32> -> vector<2x128xf32>
    %6 = arith.addf %2, %5 : vector<2x128xf32>
    %c0_8 = arith.constant 0 : index
    %c0_9 = arith.constant 0 : index
    %7 = vector.load %arg5[%c0_8, %c0_9] : memref<1x128xf32, #tpu.memory_space<vmem>>, vector<1x128xf32>
    %8 = vector.broadcast %7 : vector<1x128xf32> to vector<2x128xf32>
    %9 = arith.addf %6, %8 : vector<2x128xf32>
    %cst_10 = arith.constant 0.000000e+00 : f32
    %10 = vector.broadcast %cst_10 : f32 to vector<2x128xf32>
    %11 = arith.maximumf %9, %10 : vector<2x128xf32>
    %c0_11 = arith.constant 0 : index
    %c0_12 = arith.constant 0 : index
    %12 = vector.load %arg6[%c0_11, %c0_12] : memref<128x128xf32, #tpu.memory_space<vmem>>, vector<128x128xf32>
    %cst_13 = arith.constant dense<0.000000e+00> : vector<2x128xf32>
    %13 = tpu.matmul %11, %12, %cst_13 {dimension_numbers = #tpu.dot_dimension_numbers<[1], [0], [0], [1], [0, 0, 1, 1], [], []>} : vector<2x128xf32>, vector<128x128xf32>, vector<2x128xf32> -> vector<2x128xf32>
    %c0_14 = arith.constant 0 : index
    %c0_15 = arith.constant 0 : index
    %14 = vector.load %arg7[%c0_14, %c0_15] : memref<1x128xf32, #tpu.memory_space<vmem>>, vector<1x128xf32>
    %15 = vector.broadcast %14 : vector<1x128xf32> to vector<2x128xf32>
    %16 = arith.addf %13, %15 : vector<2x128xf32>
    %cst_16 = arith.constant 0.000000e+00 : f32
    %17 = vector.broadcast %cst_16 : f32 to vector<2x128xf32>
    %18 = arith.maximumf %16, %17 : vector<2x128xf32>
    %c0_17 = arith.constant 0 : index
    %c0_18 = arith.constant 0 : index
    %19 = vector.load %arg8[%c0_17, %c0_18] : memref<128x128xf32, #tpu.memory_space<vmem>>, vector<128x128xf32>
    %cst_19 = arith.constant dense<0.000000e+00> : vector<2x128xf32>
    %20 = tpu.matmul %18, %19, %cst_19 {dimension_numbers = #tpu.dot_dimension_numbers<[1], [0], [0], [1], [0, 0, 1, 1], [], []>} : vector<2x128xf32>, vector<128x128xf32>, vector<2x128xf32> -> vector<2x128xf32>
    %c0_20 = arith.constant 0 : index
    %c0_21 = arith.constant 0 : index
    %21 = vector.load %arg9[%c0_20, %c0_21] : memref<2x128xf32, #tpu.memory_space<vmem>>, vector<2x128xf32>
    tpu.vector_store %arg9[%c0_20, %c0_21], %20 {strides = array<i32>} : memref<2x128xf32, #tpu.memory_space<vmem>>, vector<2x128xf32>,
    return
  }
  func.func @transform_0(%arg0: i32) -> (i32, i32) {
    %c0_i32 = arith.constant 0 : i32
    %c0_i32_0 = arith.constant 0 : i32
    return %arg0, %c0_i32 : i32, i32
  }
  func.func @transform_1(%arg0: i32) -> (i32, i32) {
    %c0_i32 = arith.constant 0 : i32
    %c0_i32_0 = arith.constant 0 : i32
    return %arg0, %c0_i32 : i32, i32
  }
  func.func @transform_2(%arg0: i32) -> (i32, i32) {
    %c0_i32 = arith.constant 0 : i32
    %c0_i32_0 = arith.constant 0 : i32
    %c0_i32_1 = arith.constant 0 : i32
    return %c0_i32, %c0_i32_0 : i32, i32
  }
  func.func @transform_3(%arg0: i32) -> (i32, i32) {
    %c0_i32 = arith.constant 0 : i32
    %c0_i32_0 = arith.constant 0 : i32
    %c0_i32_1 = arith.constant 0 : i32
    return %c0_i32, %c0_i32_0 : i32, i32
  }
  func.func @transform_4(%arg0: i32) -> (i32, i32) {
    %c0_i32 = arith.constant 0 : i32
    %c0_i32_0 = arith.constant 0 : i32
    %c0_i32_1 = arith.constant 0 : i32
    return %c0_i32, %c0_i32_0 : i32, i32
  }
  func.func @transform_5(%arg0: i32) -> (i32, i32) {
    %c0_i32 = arith.constant 0 : i32
    %c0_i32_0 = arith.constant 0 : i32
    %c0_i32_1 = arith.constant 0 : i32
    return %c0_i32, %c0_i32_0 : i32, i32
  }
  func.func @transform_6(%arg0: i32) -> (i32, i32) {
    %c0_i32 = arith.constant 0 : i32
    %c0_i32_0 = arith.constant 0 : i32
    %c0_i32_1 = arith.constant 0 : i32
    return %c0_i32, %c0_i32_0 : i32, i32
  }
  func.func @transform_7(%arg0: i32) -> (i32, i32) {
    %c0_i32 = arith.constant 0 : i32
    %c0_i32_0 = arith.constant 0 : i32
    %c0_i32_1 = arith.constant 0 : i32
    return %c0_i32, %c0_i32_0 : i32, i32
  }
  func.func @transform_8(%arg0: i32) -> (i32, i32) {
    %c0_i32 = arith.constant 0 : i32
    %c0_i32_0 = arith.constant 0 : i32
    return %arg0, %c0_i32 : i32, i32
  }
}

</mosaic_0001>

<llo_original>
// kernel: forward_impl.1
$region0: #{forward_impl.1}
  #allocation0 [shape = 'u32[]', space=smem, size = 0x4, offset = 0x4, fixed_abs, tag = 'smem constant byte address 0x4 - core index']
  #allocation1 [shape = 'u32[144,128]{1,0:T(1,128)}', space=vmem, size = 0x12000, scoped, tag = 'internal scratch']
  %s0 = inlined_call_operand.vmem [shape: f32[2,32], index: 0, kind: input, shape index: {}]
  %s1 = inlined_call_operand.vmem [shape: f32[2,4], index: 1, kind: input, shape index: {}]
  %s2 = inlined_call_operand.vmem [shape: f32[32,128], index: 2, kind: input, shape index: {}]
  %s3 = inlined_call_operand.vmem [shape: f32[4,128], index: 3, kind: input, shape index: {}]
  %s4 = inlined_call_operand.vmem [shape: f32[1,128], index: 4, kind: input, shape index: {}]
  %s5 = inlined_call_operand.hbm [shape: f32[128,128], index: 5, kind: input, shape index: {}]
  %s6 = inlined_call_operand.vmem [shape: f32[1,128], index: 6, kind: input, shape index: {}]
  %s7 = inlined_call_operand.hbm [shape: f32[128,128], index: 7, kind: input, shape index: {}]
  %s8 = inlined_call_operand.hbm [shape: f32[2,128], index: 8, kind: output, shape index: {}]
  %s9 = sld [smem:[#allocation0]]
  $region50: #{forward_impl.1} parent=0
    _
  %s11 = ssub.s32 1, %s9
  %s12 = scalar_select 0, %s11, %s9
  $region1: #{forward_impl.1} parent=0
    #allocation2 [shape = 'u8[65536]{0}', space=vmem, size = 0x10000, scoped, tag = 'input window, operand 5, single buffered']
    #allocation3 [shape = 's32[1]{0}', space=sflag, size = 0x4, scoped, tag = 'scoped memory for forward_impl.1']
    #allocation4 [shape = 's32[1]{0}', space=sflag, size = 0x4, scoped, tag = 'scoped memory for forward_impl.1']
    #allocation5 [shape = 'u8[65536]{0}', space=vmem, size = 0x10000, scoped, tag = 'input window, operand 7, single buffered']
    #allocation6 [shape = 's32[1]{0}', space=sflag, size = 0x4, scoped, tag = 'scoped memory for forward_impl.1']
    #allocation7 [shape = 'u8[1024]{0}', space=vmem, size = 0x400, scoped, tag = 'output window, operand 0, single buffered']
    %13 = vsyncpa [#allocation3], 0
    %14 = vsyncpa [#allocation6], 0
    %15 = vsyncpa [#allocation4], 0
    // Predicated region
    $region2: #{forward_impl.1} parent=1 // pred_check
      _
    $region3: #{forward_impl.1} parent=1 // pred_check_branch
      %17 = sbr.rel (0) target = $region5
    $region4: #{forward_impl.1} parent=1 // pred_region
      _
    $region5: #{forward_impl.1} parent=1 // pred_fallthru
      _
    // Predicated region
    $region6: #{forward_impl.1} parent=1 // pred_check
      _
    $region7: #{forward_impl.1} parent=1 // pred_check_branch
      %19 = sbr.rel (0) target = $region9
    $region8: #{forward_impl.1} parent=1 // pred_region
      _
    $region9: #{forward_impl.1} parent=1 // pred_fallthru
      _
    // Predicated region
    $region10: #{forward_impl.1} parent=1 // pred_check
      _
    $region11: #{forward_impl.1} parent=1 // pred_check_branch
      %21 = sbr.rel (0) target = $region13
    $region12: #{forward_impl.1} parent=1 // pred_region
      _
    $region13: #{forward_impl.1} parent=1 // pred_fallthru
      _
    // Predicated region
    $region14: #{forward_impl.1} parent=1 // pred_check
      _
    $region15: #{forward_impl.1} parent=1 // pred_check_branch
      %23 = sbr.rel (0) target = $region17
    $region16: #{forward_impl.1} parent=1 // pred_region
      _
    $region17: #{forward_impl.1} parent=1 // pred_fallthru
      _
    // Predicated region
    $region18: #{forward_impl.1} parent=1 // pred_check
      _
    $region19: #{forward_impl.1} parent=1 // pred_check_branch
      %25 = sbr.rel (0) target = $region21
    $region20: #{forward_impl.1} parent=1 // pred_region
      _
    $region21: #{forward_impl.1} parent=1 // pred_fallthru
      _
    // Predicated region
    $region22: #{forward_impl.1} parent=1 // pred_check
      _
    $region23: #{forward_impl.1} parent=1 // pred_check_branch
      %27 = sbr.rel (0) target = $region25
    $region24: #{forward_impl.1} parent=1 // pred_region
      %s29 = ssub.s32 2048, 2048
      %30 = vsyncadd [#allocation3], %s29
      %s31 = sshll.u32 [#allocation2], 4
      %s32 = int_to_ptr.vmem [resolvable:$true] %s31
      %37 = dma.hbm_to_vmem [thread:$0]  %s5, 2048, %s32, [#allocation3], 128, 128, 8
    $region25: #{forward_impl.1} parent=1 // pred_fallthru
      _
    // Predicated region
    $region26: #{forward_impl.1} parent=1 // pred_check
      _
    $region27: #{forward_impl.1} parent=1 // pred_check_branch
      %39 = sbr.rel (0) target = $region29
    $region28: #{forward_impl.1} parent=1 // pred_region
      _
    $region29: #{forward_impl.1} parent=1 // pred_fallthru
      _
    // Predicated region
    $region30: #{forward_impl.1} parent=1 // pred_check
      _
    $region31: #{forward_impl.1} parent=1 // pred_check_branch
      %41 = sbr.rel (0) target = $region33
    $region32: #{forward_impl.1} parent=1 // pred_region
      %s43 = ssub.s32 2048, 2048
      %44 = vsyncadd [#allocation6], %s43
      %s45 = sshll.u32 [#allocation5], 4
      %s46 = int_to_ptr.vmem [resolvable:$true] %s45
      %51 = dma.hbm_to_vmem [thread:$0]  %s7, 2048, %s46, [#allocation6], 128, 128, 8
    $region33: #{forward_impl.1} parent=1 // pred_fallthru
      _
    // Predicated region
    $region34: #{forward_impl.1} parent=1 // pred_check
      _
    $region35: #{forward_impl.1} parent=1 // pred_check_branch
      %53 = sbr.rel (0) target = $region37
    $region36: #{forward_impl.1} parent=1 // pred_region
      %54 = dma.done [#allocation3], 2048
    $region37: #{forward_impl.1} parent=1 // pred_fallthru
      _
    // Predicated region
    $region38: #{forward_impl.1} parent=1 // pred_check
      _
    $region39: #{forward_impl.1} parent=1 // pred_check_branch
      %56 = sbr.rel (0) target = $region41
    $region40: #{forward_impl.1} parent=1 // pred_region
      %57 = dma.done [#allocation6], 2048
    $region41: #{forward_impl.1} parent=1 // pred_fallthru
      _
    %v58 = vld [vmem:[%s0] sm:$0x3]
    %v59 = vld [vmem:[%s2] sm:$0xff]
    %v60 = vld [vmem:[%s2 + $0x8] sm:$0xff]
    %v61 = vld [vmem:[%s2 + $0x10] sm:$0xff]
    %v62 = vld [vmem:[%s2 + $0x18] sm:$0xff]
    %v63 = vld [vmem:[%s1] sm:$0x3]
    %v64 = vld [vmem:[%s3] sm:$0xf]
    %vm65 = vcmask 31744
    %v67 = vsel %vm65, %v63, 0
    %vm69 = vcmask 1043456
    %v71 = vsel %vm69, %v64, 0
    %73 = vmatprep.subr.mxu0 0.0
    %74 = vmatpush1.msra.mxu0 %v71
    %75 = vmatprep.subr.mxu0 0.0
    %76 = vmatpush1.msra.mxu0 0.0
    %77 = vmatprep.subr.mxu0 0.0
    %78 = vmatpush1.msra.mxu0 0.0
    %79 = vmatprep.subr.mxu0 0.0
    %80 = vmatpush1.msra.mxu0 0.0
    %81 = vmatprep.subr.mxu0 0.0
    %82 = vmatpush1.msra.mxu0 0.0
    %83 = vmatprep.subr.mxu0 0.0
    %84 = vmatpush1.msra.mxu0 0.0
    %85 = vmatprep.subr.mxu0 0.0
    %86 = vmatpush1.msra.mxu0 0.0
    %87 = vmatprep.subr.mxu0 0.0
    %88 = vmatpush1.msra.mxu0 0.0
    %89 = vmatprep.subr.mxu0 0.0
    %90 = vmatpush1.msra.mxu0 0.0
    %91 = vmatprep.subr.mxu0 0.0
    %92 = vmatpush1.msra.mxu0 0.0
    %93 = vmatprep.subr.mxu0 0.0
    %94 = vmatpush1.msra.mxu0 0.0
    %95 = vmatprep.subr.mxu0 0.0
    %96 = vmatpush1.msra.mxu0 0.0
    %97 = vmatprep.subr.mxu0 0.0
    %98 = vmatpush1.msra.mxu0 0.0
    %99 = vmatprep.subr.mxu0 0.0
    %100 = vmatpush1.msra.mxu0 0.0
    %101 = vmatprep.subr.mxu0 0.0
    %102 = vmatpush1.msra.mxu0 0.0
    %103 = vmatprep.subr.mxu0 0.0
    %104 = vmatpush1.msra.mxu0 0.0
    %105 = vmatprep.subr.mxu0 0.0
    %106 = vmatpush1.msra.mxu0 0.0
    %107 = vmatprep.subr.mxu0 0.0
    %108 = vmatpush1.msra.mxu0 0.0
    %109 = vmatprep.subr.mxu0 0.0
    %110 = vmatpush1.msra.mxu0 0.0
    %111 = vmatprep.subr.mxu0 0.0
    %112 = vmatpush1.msra.mxu0 0.0
    %113 = vmatprep.subr.mxu0 0.0
    %114 = vmatpush1.msra.mxu0 0.0
    %115 = vmatprep.subr.mxu0 0.0
    %116 = vmatpush1.msra.mxu0 0.0
    %117 = vmatprep.subr.mxu0 0.0
    %118 = vmatpush1.msra.mxu0 0.0
    %119 = vmatprep.subr.mxu0 0.0
    %120 = vmatpush1.msra.mxu0 0.0
    %121 = vmatprep.subr.mxu0 0.0
    %122 = vmatpush1.msra.mxu0 0.0
    %123 = vmatprep.subr.mxu0 0.0
    %124 = vmatpush1.msra.mxu0 0.0
    %125 = vmatprep.subr.mxu0 0.0
    %126 = vmatpush1.msra.mxu0 0.0
    %127 = vmatprep.subr.mxu0 0.0
    %128 = vmatpush1.msra.mxu0 0.0
    %129 = vmatprep.subr.mxu0 0.0
    %130 = vmatpush1.msra.mxu0 0.0
    %131 = vmatprep.subr.mxu0 0.0
    %132 = vmatpush1.msra.mxu0 0.0
    %133 = vmatprep.subr.mxu0 0.0
    %134 = vmatpush1.msra.mxu0 0.0
    %135 = vmatprep.subr.mxu0 0.0
    %136 = vmatpush1.msra.mxu0 0.0
    %137 = vmatprep.mubr.f32.mxu0 0.0
    %138 = vmatmul.mubr.f32.gmra.mrb[0].mxu0 %v67
    %v139 = vpop.f32.mrb[0].mxu0
    %v140 = vadd.f32 0.0, %v139
    %v141 = vpop.f32.mrb[0].mxu0
    %142 = vdwg.mxu0
    %vm143 = vcmask 261120
    %v145 = vsel %vm143, %v58, 0
    %147 = vmatprep.subr.mxu0 0.0
    %148 = vmatpush1.msra.mxu0 %v59
    %149 = vmatprep.subr.mxu0 0.0
    %150 = vmatpush1.msra.mxu0 %v60
    %151 = vmatprep.subr.mxu0 0.0
    %152 = vmatpush1.msra.mxu0 %v61
    %153 = vmatprep.subr.mxu0 0.0
    %154 = vmatpush1.msra.mxu0 %v62
    %155 = vmatprep.subr.mxu0 0.0
    %156 = vmatpush1.msra.mxu0 0.0
    %157 = vmatprep.subr.mxu0 0.0
    %158 = vmatpush1.msra.mxu0 0.0
    %159 = vmatprep.subr.mxu0 0.0
    %160 = vmatpush1.msra.mxu0 0.0
    %161 = vmatprep.subr.mxu0 0.0
    %162 = vmatpush1.msra.mxu0 0.0
    %163 = vmatprep.subr.mxu0 0.0
    %164 = vmatpush1.msra.mxu0 0.0
    %165 = vmatprep.subr.mxu0 0.0
    %166 = vmatpush1.msra.mxu0 0.0
    %167 = vmatprep.subr.mxu0 0.0
    %168 = vmatpush1.msra.mxu0 0.0
    %169 = vmatprep.subr.mxu0 0.0
    %170 = vmatpush1.msra.mxu0 0.0
    %171 = vmatprep.subr.mxu0 0.0
    %172 = vmatpush1.msra.mxu0 0.0
    %173 = vmatprep.subr.mxu0 0.0
    %174 = vmatpush1.msra.mxu0 0.0
    %175 = vmatprep.subr.mxu0 0.0
    %176 = vmatpush1.msra.mxu0 0.0
    %177 = vmatprep.subr.mxu0 0.0
    %178 = vmatpush1.msra.mxu0 0.0
    %179 = vmatprep.subr.mxu0 0.0
    %180 = vmatpush1.msra.mxu0 0.0
    %181 = vmatprep.subr.mxu0 0.0
    %182 = vmatpush1.msra.mxu0 0.0
    %183 = vmatprep.subr.mxu0 0.0
    %184 = vmatpush1.msra.mxu0 0.0
    %185 = vmatprep.subr.mxu0 0.0
    %186 = vmatpush1.msra.mxu0 0.0
    %187 = vmatprep.subr.mxu0 0.0
    %188 = vmatpush1.msra.mxu0 0.0
    %189 = vmatprep.subr.mxu0 0.0
    %190 = vmatpush1.msra.mxu0 0.0
    %191 = vmatprep.subr.mxu0 0.0
    %192 = vmatpush1.msra.mxu0 0.0
    %193 = vmatprep.subr.mxu0 0.0
    %194 = vmatpush1.msra.mxu0 0.0
    %195 = vmatprep.subr.mxu0 0.0
    %196 = vmatpush1.msra.mxu0 0.0
    %197 = vmatprep.subr.mxu0 0.0
    %198 = vmatpush1.msra.mxu0 0.0
    %199 = vmatprep.subr.mxu0 0.0
    %200 = vmatpush1.msra.mxu0 0.0
    %201 = vmatprep.subr.mxu0 0.0
    %202 = vmatpush1.msra.mxu0 0.0
    %203 = vmatprep.subr.mxu0 0.0
    %204 = vmatpush1.msra.mxu0 0.0
    %205 = vmatprep.subr.mxu0 0.0
    %206 = vmatpush1.msra.mxu0 0.0
    %207 = vmatprep.subr.mxu0 0.0
    %208 = vmatpush1.msra.mxu0 0.0
    %209 = vmatprep.subr.mxu0 0.0
    %210 = vmatpush1.msra.mxu0 0.0
    %211 = vmatprep.mubr.f32.mxu0 0.0
    %212 = vmatmul.mubr.f32.gmra.mrb[0].mxu0 %v145
    %v213 = vpop.f32.mrb[0].mxu0
    %v214 = vadd.f32 %v140, %v213
    %v215 = vpop.f32.mrb[0].mxu0
    %216 = vdwg.mxu0
    %v217 = vld [vmem:[%s4] sm:$0x1]
    %v219 = vlaneseq
    %v220 = vshrl.u32 %v219, 7
    %v221 = vsub.s32 0, %v220
    %v222 = vrot.slane %v217, %v221
    %v224 = vadd.f32 %v214, %v222
    %v225 = vmax.f32 %v224, 0.0
    %v226 = vld [vmem:[#allocation2] sm:$0xff]
    %v227 = vld [vmem:[#allocation2 + $0x8] sm:$0xff]
    %v228 = vld [vmem:[#allocation2 + $0x10] sm:$0xff]
    %v229 = vld [vmem:[#allocation2 + $0x18] sm:$0xff]
    %v230 = vld [vmem:[#allocation2 + $0x20] sm:$0xff]
    %v231 = vld [vmem:[#allocation2 + $0x28] sm:$0xff]
    %v232 = vld [vmem:[#allocation2 + $0x30] sm:$0xff]
    %v233 = vld [vmem:[#allocation2 + $0x38] sm:$0xff]
    %v234 = vld [vmem:[#allocation2 + $0x40] sm:$0xff]
    %v235 = vld [vmem:[#allocation2 + $0x48] sm:$0xff]
    %v236 = vld [vmem:[#allocation2 + $0x50] sm:$0xff]
    %v237 = vld [vmem:[#allocation2 + $0x58] sm:$0xff]
    %v238 = vld [vmem:[#allocation2 + $0x60] sm:$0xff]
    %v239 = vld [vmem:[#allocation2 + $0x68] sm:$0xff]
    %v240 = vld [vmem:[#allocation2 + $0x70] sm:$0xff]
    %v241 = vld [vmem:[#allocation2 + $0x78] sm:$0xff]
    %v242 = vld [vmem:[%s6] sm:$0x1]
    %v244 = vlaneseq
    %v245 = vshrl.u32 %v244, 7
    %v246 = vsub.s32 0, %v245
    %v247 = vrot.slane %v242, %v246
    %249 = vmatprep.subr.mxu0 0.0
    %250 = vmatpush1.msra.mxu0 %v226
    %251 = vmatprep.subr.mxu0 0.0
    %252 = vmatpush1.msra.mxu0 %v227
    %253 = vmatprep.subr.mxu0 0.0
    %254 = vmatpush1.msra.mxu0 %v228
    %255 = vmatprep.subr.mxu0 0.0
    %256 = vmatpush1.msra.mxu0 %v229
    %257 = vmatprep.subr.mxu0 0.0
    %258 = vmatpush1.msra.mxu0 %v230
    %259 = vmatprep.subr.mxu0 0.0
    %260 = vmatpush1.msra.mxu0 %v231
    %261 = vmatprep.subr.mxu0 0.0
    %262 = vmatpush1.msra.mxu0 %v232
    %263 = vmatprep.subr.mxu0 0.0
    %264 = vmatpush1.msra.mxu0 %v233
    %265 = vmatprep.subr.mxu0 0.0
    %266 = vmatpush1.msra.mxu0 %v234
    %267 = vmatprep.subr.mxu0 0.0
    %268 = vmatpush1.msra.mxu0 %v235
    %269 = vmatprep.subr.mxu0 0.0
    %270 = vmatpush1.msra.mxu0 %v236
    %271 = vmatprep.subr.mxu0 0.0
    %272 = vmatpush1.msra.mxu0 %v237
    %273 = vmatprep.subr.mxu0 0.0
    %274 = vmatpush1.msra.mxu0 %v238
    %275 = vmatprep.subr.mxu0 0.0
    %276 = vmatpush1.msra.mxu0 %v239
    %277 = vmatprep.subr.mxu0 0.0
    %278 = vmatpush1.msra.mxu0 %v240
    %279 = vmatprep.subr.mxu0 0.0
    %280 = vmatpush1.msra.mxu0 %v241
    %281 = vmatprep.subr.mxu0 0.0
    %282 = vmatpush1.msra.mxu0 0.0
    %283 = vmatprep.subr.mxu0 0.0
    %284 = vmatpush1.msra.mxu0 0.0
    %285 = vmatprep.subr.mxu0 0.0
    %286 = vmatpush1.msra.mxu0 0.0
    %287 = vmatprep.subr.mxu0 0.0
    %288 = vmatpush1.msra.mxu0 0.0
    %289 = vmatprep.subr.mxu0 0.0
    %290 = vmatpush1.msra.mxu0 0.0
    %291 = vmatprep.subr.mxu0 0.0
    %292 = vmatpush1.msra.mxu0 0.0
    %293 = vmatprep.subr.mxu0 0.0
    %294 = vmatpush1.msra.mxu0 0.0
    %295 = vmatprep.subr.mxu0 0.0
    %296 = vmatpush1.msra.mxu0 0.0
    %297 = vmatprep.subr.mxu0 0.0
    %298 = vmatpush1.msra.mxu0 0.0
    %299 = vmatprep.subr.mxu0 0.0
    %300 = vmatpush1.msra.mxu0 0.0
    %301 = vmatprep.subr.mxu0 0.0
    %302 = vmatpush1.msra.mxu0 0.0
    %303 = vmatprep.subr.mxu0 0.0
    %304 = vmatpush1.msra.mxu0 0.0
    %305 = vmatprep.subr.mxu0 0.0
    %306 = vmatpush1.msra.mxu0 0.0
    %307 = vmatprep.subr.mxu0 0.0
    %308 = vmatpush1.msra.mxu0 0.0
    %309 = vmatprep.subr.mxu0 0.0
    %310 = vmatpush1.msra.mxu0 0.0
    %311 = vmatprep.subr.mxu0 0.0
    %312 = vmatpush1.msra.mxu0 0.0
    %313 = vmatprep.mubr.f32.mxu0 0.0
    %314 = vmatmul.mubr.f32.gmra.mrb[0].mxu0 %v225
    %v315 = vpop.f32.mrb[0].mxu0
    %v316 = vadd.f32 %v247, %v315
    %v317 = vpop.f32.mrb[0].mxu0
    %318 = vdwg.mxu0
    %v319 = vmax.f32 %v316, 0.0
    %v320 = vld [vmem:[#allocation5] sm:$0xff]
    %v321 = vld [vmem:[#allocation5 + $0x8] sm:$0xff]
    %v322 = vld [vmem:[#allocation5 + $0x10] sm:$0xff]
    %v323 = vld [vmem:[#allocation5 + $0x18] sm:$0xff]
    %v324 = vld [vmem:[#allocation5 + $0x20] sm:$0xff]
    %v325 = vld [vmem:[#allocation5 + $0x28] sm:$0xff]
    %v326 = vld [vmem:[#allocation5 + $0x30] sm:$0xff]
    %v327 = vld [vmem:[#allocation5 + $0x38] sm:$0xff]
    %v328 = vld [vmem:[#allocation5 + $0x40] sm:$0xff]
    %v329 = vld [vmem:[#allocation5 + $0x48] sm:$0xff]
    %v330 = vld [vmem:[#allocation5 + $0x50] sm:$0xff]
    %v331 = vld [vmem:[#allocation5 + $0x58] sm:$0xff]
    %v332 = vld [vmem:[#allocation5 + $0x60] sm:$0xff]
    %v333 = vld [vmem:[#allocation5 + $0x68] sm:$0xff]
    %v334 = vld [vmem:[#allocation5 + $0x70] sm:$0xff]
    %v335 = vld [vmem:[#allocation5 + $0x78] sm:$0xff]
    %336 = vmatprep.subr.mxu0 0.0
    %337 = vmatpush1.msra.mxu0 %v320
    %338 = vmatprep.subr.mxu0 0.0
    %339 = vmatpush1.msra.mxu0 %v321
    %340 = vmatprep.subr.mxu0 0.0
    %341 = vmatpush1.msra.mxu0 %v322
    %342 = vmatprep.subr.mxu0 0.0
    %343 = vmatpush1.msra.mxu0 %v323
    %344 = vmatprep.subr.mxu0 0.0
    %345 = vmatpush1.msra.mxu0 %v324
    %346 = vmatprep.subr.mxu0 0.0
    %347 = vmatpush1.msra.mxu0 %v325
    %348 = vmatprep.subr.mxu0 0.0
    %349 = vmatpush1.msra.mxu0 %v326
    %350 = vmatprep.subr.mxu0 0.0
    %351 = vmatpush1.msra.mxu0 %v327
    %352 = vmatprep.subr.mxu0 0.0
    %353 = vmatpush1.msra.mxu0 %v328
    %354 = vmatprep.subr.mxu0 0.0
    %355 = vmatpush1.msra.mxu0 %v329
    %356 = vmatprep.subr.mxu0 0.0
    %357 = vmatpush1.msra.mxu0 %v330
    %358 = vmatprep.subr.mxu0 0.0
    %359 = vmatpush1.msra.mxu0 %v331
    %360 = vmatprep.subr.mxu0 0.0
    %361 = vmatpush1.msra.mxu0 %v332
    %362 = vmatprep.subr.mxu0 0.0
    %363 = vmatpush1.msra.mxu0 %v333
    %364 = vmatprep.subr.mxu0 0.0
    %365 = vmatpush1.msra.mxu0 %v334
    %366 = vmatprep.subr.mxu0 0.0
    %367 = vmatpush1.msra.mxu0 %v335
    %368 = vmatprep.subr.mxu0 0.0
    %369 = vmatpush1.msra.mxu0 0.0
    %370 = vmatprep.subr.mxu0 0.0
    %371 = vmatpush1.msra.mxu0 0.0
    %372 = vmatprep.subr.mxu0 0.0
    %373 = vmatpush1.msra.mxu0 0.0
    %374 = vmatprep.subr.mxu0 0.0
    %375 = vmatpush1.msra.mxu0 0.0
    %376 = vmatprep.subr.mxu0 0.0
    %377 = vmatpush1.msra.mxu0 0.0
    %378 = vmatprep.subr.mxu0 0.0
    %379 = vmatpush1.msra.mxu0 0.0
    %380 = vmatprep.subr.mxu0 0.0
    %381 = vmatpush1.msra.mxu0 0.0
    %382 = vmatprep.subr.mxu0 0.0
    %383 = vmatpush1.msra.mxu0 0.0
    %384 = vmatprep.subr.mxu0 0.0
    %385 = vmatpush1.msra.mxu0 0.0
    %386 = vmatprep.subr.mxu0 0.0
    %387 = vmatpush1.msra.mxu0 0.0
    %388 = vmatprep.subr.mxu0 0.0
    %389 = vmatpush1.msra.mxu0 0.0
    %390 = vmatprep.subr.mxu0 0.0
    %391 = vmatpush1.msra.mxu0 0.0
    %392 = vmatprep.subr.mxu0 0.0
    %393 = vmatpush1.msra.mxu0 0.0
    %394 = vmatprep.subr.mxu0 0.0
    %395 = vmatpush1.msra.mxu0 0.0
    %396 = vmatprep.subr.mxu0 0.0
    %397 = vmatpush1.msra.mxu0 0.0
    %398 = vmatprep.subr.mxu0 0.0
    %399 = vmatpush1.msra.mxu0 0.0
    %400 = vmatprep.mubr.f32.mxu0 0.0
    %401 = vmatmul.mubr.f32.gmra.mrb[0].mxu0 %v319
    %v402 = vpop.f32.mrb[0].mxu0
    %v403 = vadd.f32 0.0, %v402
    %v404 = vpop.f32.mrb[0].mxu0
    %405 = vdwg.mxu0
    %406 = vst [vmem:[#allocation7] sm:$0x3] %v403
    // Predicated region
    $region42: #{forward_impl.1} parent=1 // pred_check
      _
    $region43: #{forward_impl.1} parent=1 // pred_check_branch
      %408 = sbr.rel (0) target = $region45
    $region44: #{forward_impl.1} parent=1 // pred_region
      %s410 = ssub.s32 32, 32
      %411 = vsyncadd [#allocation4], %s410
      %s413 = sshll.u32 [#allocation7], 4
      %s414 = int_to_ptr.vmem [resolvable:$true] %s413
      %416 = dma.vmem_to_hbm [thread:$0]  %s414, 32, %s8, [#allocation4]
    $region45: #{forward_impl.1} parent=1 // pred_fallthru
      _
    // Predicated region
    $region46: #{forward_impl.1} parent=1 // pred_check
      _
    $region47: #{forward_impl.1} parent=1 // pred_check_branch
      %418 = sbr.rel (0) target = $region49
    $region48: #{forward_impl.1} parent=1 // pred_region
      %419 = dma.done [#allocation4], 32
    $region49: #{forward_impl.1} parent=1 // pred_fallthru
      _
    %420 = vsyncpa [#allocation3], 1
    %421 = vsyncpa [#allocation6], 1
    %422 = vsyncpa [#allocation4], 1

</llo_original>
